<compile_context>
chip_gen: v5e
topology: v5e:2x2
jax: 0.10.0
libtpu: 0.0.40
codegen_flags: <defaults>
</compile_context>

<pallas_src>
import functools

import jax
import jax.numpy as jnp
from jax import lax
from jax.experimental import pallas as pl
from jax.experimental.pallas import tpu as pltpu


def _mish(x):
    # mish(x) = x * tanh(softplus(x)); jax.nn.softplus is overflow-safe.
    return x * jnp.tanh(jax.nn.softplus(x))


def _round_up(n, m):
    return ((n + m - 1) // m) * m


def liquid_recurrent_kernel(t_chunk, b_chunk, unfolding_steps, n_pad,
                            x0_ref, i_ref, dt_ref,
                            wrec_t_ref, win_t_ref, b_ref, a_ref, inv_tau_ref,
                            wout_t_ref, bout_ref,
                            out_ref,
                            state_scr, h_scr):
    # Re-initialise the carried recurrent state at the start of every batch
    # chunk's time loop (time is the innermost, "arbitrary" grid axis).
    @pl.when(pl.program_id(1) == 0)
    def _():
        state_scr[...] = x0_ref[...]

    # Hoisted per-chunk input projection (bias folded in here).  Result lives in
    # the merged scratch h_scr; each timestep later overwrites its own rows with
    # the post-unfold hidden state, so one scratch serves both purposes.
    h_scr[...] = (jnp.dot(i_ref[...], win_t_ref[...],
                          preferred_element_type=jnp.float32) + b_ref[...])

    # Loop-invariant broadcasts hoisted once (JAX does not CSE broadcast_in_dim).
    a_b = jnp.broadcast_to(a_ref[...], (b_chunk, n_pad))
    inv_tau_b = jnp.broadcast_to(inv_tau_ref[...], (b_chunk, n_pad))

    def time_step(t, x):
        row = pl.multiple_of(t * b_chunk, 8)
        inp = h_scr[pl.ds(row, b_chunk), :]            # (b_chunk, n_pad)
        dt = dt_ref[pl.ds(row, b_chunk), :]            # (b_chunk, 1), already /U
        dt_b = jnp.broadcast_to(dt, (b_chunk, n_pad))
        da = dt_b * a_b                                # invariant across unfolds
        den0 = 1.0 + dt_b * inv_tau_b                  # invariant across unfolds

        def unfold(_, x):
            # W_rec^T is deliberately re-read from VMEM each iteration: vld slots
            # are idle in this MXU/EUP latency-bound loop and not pinning the
            # 128x128 f32 tile frees vregs for the unrolled body.
            f = jnp.tanh(jnp.dot(x, wrec_t_ref[...],
                                 preferred_element_type=jnp.float32) + inp)
            num = x + da * f
            den = den0 + dt_b * f
            r = pl.reciprocal(den, approx=True)
            r = r * (2.0 - den * r)   # one Newton step -> ~f32-exact division
            return num * r

        x = lax.fori_loop(0, unfolding_steps, unfold, x, unroll=True)
        h_scr[pl.ds(row, b_chunk), :] = x              # overwrite inp rows (merged)
        return x

    state_scr[...] = lax.fori_loop(0, t_chunk, time_step, state_scr[...])

    # Deferred, lane-dense per-chunk output projection (one matmul per chunk).
    out_ref[...] = (jnp.dot(h_scr[...].astype(wout_t_ref.dtype), wout_t_ref[...],
                            preferred_element_type=jnp.float32)
                    + bout_ref[...]).astype(out_ref.dtype)


def liquid_recurrent_forward(i, delta_t, x0, params, unfolding_steps, *,
                             time_chunk=64, projection_dtype=jnp.float32):
    """i: (I, B, T), delta_t: (B, T), x0: (B, N) pre-mish.  Returns (B, O, T)."""
    I_, B, T = i.shape
    N = params["w_rec"].shape[0]
    O = params["w_out"].shape[0]

    # Batch chunking: >=2 row-chunks of >=8 sublanes when possible so the
    # "parallel" batch grid axis can be split across TensorCores (v7x megacore).
    n_b = 2 if B > 8 else 1
    b_chunk = _round_up(-(-B // n_b), 8)
    B_pad = n_b * b_chunk

    N_pad = _round_up(N, 128)
    I_pad = _round_up(I_, 128)
    O_pad = _round_up(O, 128)

    t_chunk = max(1, min(time_chunk, T))
    T_pad = _round_up(T, t_chunk)
    n_t = T_pad // t_chunk
    blk_rows = t_chunk * b_chunk

    f32 = jnp.float32
    pdt = jnp.dtype(projection_dtype)

    # Time-major, zero-padded input, regrouped as (batch_chunk, T*b_chunk, I).
    # Zero padding is exact: padded lanes/rows provably stay zero / are discarded,
    # and padded timesteps have dt == 0 so the state passes through unchanged.
    i_tbi = jnp.transpose(i, (2, 1, 0)).astype(f32)                    # (T, B, I)
    i_pad = jnp.zeros((T_pad, B_pad, I_pad), f32).at[:T, :B, :I_].set(i_tbi)
    i_arr = (i_pad.reshape(T_pad, n_b, b_chunk, I_pad)
                  .transpose(1, 0, 2, 3)
                  .reshape(n_b, T_pad * b_chunk, I_pad)
                  .astype(pdt))

    dt_scaled = jnp.transpose(delta_t, (1, 0)).astype(f32) / unfolding_steps
    dt_pad = jnp.zeros((T_pad, B_pad, 1), f32).at[:T, :B, 0].set(dt_scaled)
    dt_arr = (dt_pad.reshape(T_pad, n_b, b_chunk, 1)
                    .transpose(1, 0, 2, 3)
                    .reshape(n_b, T_pad * b_chunk, 1))

    x0_m = _mish(x0.astype(f32))
    x0_arr = (jnp.zeros((B_pad, N_pad), f32).at[:B, :N].set(x0_m)
              .reshape(n_b, b_chunk, N_pad))

    wrec_t = jnp.zeros((N_pad, N_pad), f32).at[:N, :N].set(params["w_rec"].T)
    win_t = jnp.zeros((I_pad, N_pad), f32).at[:I_, :N].set(params["w_in"].T).astype(pdt)
    bias = jnp.zeros((1, N_pad), f32).at[0, :N].set(params["bias"])
    a = jnp.zeros((1, N_pad), f32).at[0, :N].set(params["a"])
    inv_tau = jnp.zeros((1, N_pad), f32).at[0, :N].set(1.0 / params["tau"])
    wout_t = jnp.zeros((N_pad, O_pad), f32).at[:N, :O].set(params["w_out"].T).astype(pdt)
    bout = jnp.zeros((1, O_pad), f32).at[0, :O].set(params["b_out"])

    kernel = functools.partial(liquid_recurrent_kernel,
                               t_chunk, b_chunk, unfolding_steps, N_pad)

    # Explicit scoped-VMEM budget from the actual chunked footprint (+headroom).
    f32b = 4
    pdtb = pdt.itemsize
    buf_bytes = 2 * (blk_rows * I_pad * pdtb          # input block (double-buffered)
                     + blk_rows * 128 * f32b          # dt block (lane-padded to 128)
                     + blk_rows * O_pad * f32b        # output block
                     + b_chunk * N_pad * f32b)        # x0 block
    weight_bytes = 2 * ((N_pad * N_pad) * f32b
                        + I_pad * N_pad * pdtb
                        + N_pad * O_pad * pdtb
                        + 4 * 8 * max(N_pad, O_pad) * f32b)   # small (1, X) operands
    scratch_bytes = (b_chunk + blk_rows) * N_pad * f32b
    vmem_bytes = min(int(1.5 * (buf_bytes + weight_bytes + scratch_bytes))
                     + (2 << 20), 64 << 20)

    cost = pl.CostEstimate(
        flops=int(2 * T_pad * unfolding_steps * B_pad * N_pad * N_pad
                  + 2 * T_pad * B_pad * (I_pad + O_pad) * N_pad
                  + 10 * T_pad * unfolding_steps * B_pad * N_pad),
        transcendentals=int(2 * T_pad * unfolding_steps * B_pad * N_pad),
        bytes_accessed=int(i_arr.size * pdtb + dt_arr.size * f32b
                           + x0_arr.size * f32b
                           + N_pad * N_pad * f32b
                           + (I_pad + O_pad) * N_pad * pdtb
                           + n_b * T_pad * b_chunk * O_pad * f32b))

    out_flat = pl.pallas_call(
        kernel,
        out_shape=jax.ShapeDtypeStruct((n_b, T_pad * b_chunk, O_pad), f32),
        grid_spec=pltpu.PrefetchScalarGridSpec(
            num_scalar_prefetch=0,
            grid=(n_b, n_t),
            in_specs=[
                pl.BlockSpec((None, b_chunk, N_pad), lambda b, t: (b, 0, 0)),   # x0 (mish'd)
                pl.BlockSpec((None, blk_rows, I_pad), lambda b, t: (b, t, 0)),  # inputs
                pl.BlockSpec((None, blk_rows, 1), lambda b, t: (b, t, 0)),      # dt / U
                pl.BlockSpec((N_pad, N_pad), lambda b, t: (0, 0)),              # W_rec^T
                pl.BlockSpec((I_pad, N_pad), lambda b, t: (0, 0)),              # W_in^T
                pl.BlockSpec((1, N_pad), lambda b, t: (0, 0)),                  # bias
                pl.BlockSpec((1, N_pad), lambda b, t: (0, 0)),                  # A
                pl.BlockSpec((1, N_pad), lambda b, t: (0, 0)),                  # 1/tau
                pl.BlockSpec((N_pad, O_pad), lambda b, t: (0, 0)),              # W_out^T
                pl.BlockSpec((1, O_pad), lambda b, t: (0, 0)),                  # b_out
            ],
            out_specs=pl.BlockSpec((None, blk_rows, O_pad), lambda b, t: (b, t, 0)),
            scratch_shapes=[
                pltpu.VMEM((b_chunk, N_pad), f32),     # carried recurrent state
                pltpu.VMEM((blk_rows, N_pad), f32),    # merged inp-proj / hidden
            ],
        ),
        compiler_params=pltpu.CompilerParams(
            dimension_semantics=("parallel", "arbitrary"),
            vmem_limit_bytes=vmem_bytes),
        cost_estimate=cost,
    )(x0_arr, i_arr, dt_arr, wrec_t, win_t, bias, a, inv_tau, wout_t, bout)

    out = (out_flat.reshape(n_b, T_pad, b_chunk, O_pad)
                   .transpose(1, 0, 2, 3)
                   .reshape(T_pad, B_pad, O_pad)[:T, :B, :O])           # (T, B, O)
    return jnp.transpose(out, (1, 2, 0))                                # (B, O, T)


def reference_forward(i, delta_t, x0, params, unfolding_steps):
    """Pure-JAX reference mirroring the PyTorch forward semantics (exact division)."""
    i_tbi = jnp.transpose(i, (2, 1, 0))
    T = i.shape[2]
    x = _mish(x0)
    outs = []
    for t in range(T):
        it = i_tbi[t]
        dt = delta_t[:, t][:, None] / unfolding_steps
        for _ in range(unfolding_steps):
            f = jnp.tanh(x @ params["w_rec"].T + it @ params["w_in"].T + params["bias"])
            x = (x + dt * params["a"] * f) / (1.0 + dt * (1.0 / params["tau"] + f))
        outs.append(x @ params["w_out"].T + params["b_out"])
    return jnp.stack(outs, -1)


if __name__ == "__main__":
    # Small, module-consistent shapes; chosen to exercise batch chunking (2 chunks,
    # padded rows) and time chunking (2 chunks, padded tail timesteps).
    NEURON = 32      # neuron_number
    IN_SIZE = 16     # input_size
    UNFOLD = 6       # unfolding_steps
    OUT_SIZE = 8     # output_size
    BATCH = 12
    SEQ = 12

    key = jax.random.PRNGKey(0)
    keys = jax.random.split(key, 10)

    # Deterministic parameter init (synthetic weights, Linear-style scaling).
    params = {
        "w_rec": jax.random.normal(keys[0], (NEURON, NEURON), jnp.float32) / jnp.sqrt(NEURON),
        "w_in":  jax.random.normal(keys[1], (NEURON, IN_SIZE), jnp.float32) / jnp.sqrt(IN_SIZE),
        "bias":  jax.random.normal(keys[2], (NEURON,), jnp.float32) * 0.1,
        "a":     jax.random.normal(keys[3], (NEURON,), jnp.float32),
        "tau":   jax.random.uniform(keys[4], (NEURON,), jnp.float32, minval=0.5, maxval=2.0),
        "w_out": jax.random.normal(keys[5], (OUT_SIZE, NEURON), jnp.float32) / jnp.sqrt(NEURON),
        "b_out": jax.random.normal(keys[6], (OUT_SIZE,), jnp.float32) * 0.1,
    }

    # Inputs: i is (input_size, batch, seq) so that i.size(1) == batch; delta_t is (batch, seq).
    i = jax.random.normal(keys[7], (IN_SIZE, BATCH, SEQ), jnp.float32)
    delta_t = jax.random.uniform(keys[8], (BATCH, SEQ), jnp.float32, minval=0.1, maxval=1.0)
    x0 = jax.random.normal(keys[9], (BATCH, NEURON), jnp.float32)  # pre-mish initial state

    out = liquid_recurrent_forward(i, delta_t, x0, params, UNFOLD, time_chunk=8)
    out = jax.block_until_ready(out)

    ref = reference_forward(i, delta_t, x0, params, UNFOLD)
    assert out.shape == (BATCH, OUT_SIZE, SEQ), out.shape
    max_err = float(jnp.max(jnp.abs(out - ref)))
    assert jnp.allclose(out, ref, atol=1e-2, rtol=1e-2), max_err

    print("KERNEL_OK")
</pallas_src>

<mosaic_0001>
module attributes {stable_mosaic.version = 11 : i64} {
  func.func @liquid_recurrent_kernel(%arg0: i32, %arg1: i32, %arg2: memref<1x8x128xf32, #tpu.memory_space<vmem>>, %arg3: memref<1x64x128xf32, #tpu.memory_space<vmem>>, %arg4: memref<1x64x1xf32, #tpu.memory_space<vmem>>, %arg5: memref<128x128xf32, #tpu.memory_space<vmem>>, %arg6: memref<128x128xf32, #tpu.memory_space<vmem>>, %arg7: memref<1x128xf32, #tpu.memory_space<vmem>>, %arg8: memref<1x128xf32, #tpu.memory_space<vmem>>, %arg9: memref<1x128xf32, #tpu.memory_space<vmem>>, %arg10: memref<128x128xf32, #tpu.memory_space<vmem>>, %arg11: memref<1x128xf32, #tpu.memory_space<vmem>>, %arg12: memref<1x64x128xf32, #tpu.memory_space<vmem>>, %arg13: memref<8x128xf32, #tpu.memory_space<vmem>>, %arg14: memref<64x128xf32, #tpu.memory_space<vmem>>) attributes {dimension_semantics = [#tpu.dimension_semantics<parallel>, #tpu.dimension_semantics<arbitrary>], iteration_bounds = array<i64: 2, 2>, scalar_prefetch = 0 : i64, scratch_operands = 2 : i64, tpu.core_type = #tpu.core_type<tc>, window_params = [{transform_indices = @transform_0, window_bounds = array<i64: 1, 8, 128>}, {transform_indices = @transform_1, window_bounds = array<i64: 1, 64, 128>}, {transform_indices = @transform_2, window_bounds = array<i64: 1, 64, 1>}, {pipeline_mode = #tpu.pipeline_mode<synchronous>, transform_indices = @transform_3, window_bounds = array<i64: 128, 128>}, {pipeline_mode = #tpu.pipeline_mode<synchronous>, transform_indices = @transform_4, window_bounds = array<i64: 128, 128>}, {pipeline_mode = #tpu.pipeline_mode<synchronous>, transform_indices = @transform_5, window_bounds = array<i64: 1, 128>}, {pipeline_mode = #tpu.pipeline_mode<synchronous>, transform_indices = @transform_6, window_bounds = array<i64: 1, 128>}, {pipeline_mode = #tpu.pipeline_mode<synchronous>, transform_indices = @transform_7, window_bounds = array<i64: 1, 128>}, {pipeline_mode = #tpu.pipeline_mode<synchronous>, transform_indices = @transform_8, window_bounds = array<i64: 128, 128>}, {pipeline_mode = #tpu.pipeline_mode<synchronous>, transform_indices = @transform_9, window_bounds = array<i64: 1, 128>}, {transform_indices = @transform_10, window_bounds = array<i64: 1, 64, 128>}]} {
    %c0_i32 = arith.constant 0 : i32
    %0 = arith.cmpi eq, %arg1, %c0_i32 : i32
    %1 = arith.extui %0 : i1 to i32
    %c0_i32_0 = arith.constant 0 : i32
    %2 = arith.cmpi ne, %1, %c0_i32_0 : i32
    scf.if %2 {
      %c0_29 = arith.constant 0 : index
      %c0_30 = arith.constant 0 : index
      %c0_31 = arith.constant 0 : index
      %30 = vector.load %arg2[%c0_29, %c0_30, %c0_31] : memref<1x8x128xf32, #tpu.memory_space<vmem>>, vector<1x8x128xf32>
      %31 = vector.shape_cast %30 : vector<1x8x128xf32> to vector<8x128xf32>
      %c0_32 = arith.constant 0 : index
      %c0_33 = arith.constant 0 : index
      %32 = vector.load %arg13[%c0_32, %c0_33] : memref<8x128xf32, #tpu.memory_space<vmem>>, vector<8x128xf32>
      tpu.vector_store %arg13[%c0_32, %c0_33], %31 {strides = array<i32>} : memref<8x128xf32, #tpu.memory_space<vmem>>, vector<8x128xf32>,
    } else {
    }
    %c0 = arith.constant 0 : index
    %c0_1 = arith.constant 0 : index
    %c0_2 = arith.constant 0 : index
    %3 = vector.load %arg3[%c0, %c0_1, %c0_2] : memref<1x64x128xf32, #tpu.memory_space<vmem>>, vector<1x64x128xf32>
    %4 = vector.shape_cast %3 : vector<1x64x128xf32> to vector<64x128xf32>
    %c0_3 = arith.constant 0 : index
    %c0_4 = arith.constant 0 : index
    %5 = vector.load %arg6[%c0_3, %c0_4] : memref<128x128xf32, #tpu.memory_space<vmem>>, vector<128x128xf32>
    %cst = arith.constant dense<0.000000e+00> : vector<64x128xf32>
    %6 = tpu.matmul %4, %5, %cst {dimension_numbers = #tpu.dot_dimension_numbers<[1], [0], [0], [1], [0, 0, 1, 1], [], []>} : vector<64x128xf32>, vector<128x128xf32>, vector<64x128xf32> -> vector<64x128xf32>
    %c0_5 = arith.constant 0 : index
    %c0_6 = arith.constant 0 : index
    %7 = vector.load %arg7[%c0_5, %c0_6] : memref<1x128xf32, #tpu.memory_space<vmem>>, vector<1x128xf32>
    %8 = vector.broadcast %7 : vector<1x128xf32> to vector<64x128xf32>
    %9 = arith.addf %6, %8 : vector<64x128xf32>
    %c0_7 = arith.constant 0 : index
    %c0_8 = arith.constant 0 : index
    %10 = vector.load %arg14[%c0_7, %c0_8] : memref<64x128xf32, #tpu.memory_space<vmem>>, vector<64x128xf32>
    tpu.vector_store %arg14[%c0_7, %c0_8], %9 {strides = array<i32>} : memref<64x128xf32, #tpu.memory_space<vmem>>, vector<64x128xf32>,
    %c0_9 = arith.constant 0 : index
    %c0_10 = arith.constant 0 : index
    %11 = vector.load %arg8[%c0_9, %c0_10] : memref<1x128xf32, #tpu.memory_space<vmem>>, vector<1x128xf32>
    %12 = vector.shape_cast %11 : vector<1x128xf32> to vector<1x128xf32>
    %13 = vector.broadcast %12 : vector<1x128xf32> to vector<8x128xf32>
    %c0_11 = arith.constant 0 : index
    %c0_12 = arith.constant 0 : index
    %14 = vector.load %arg9[%c0_11, %c0_12] : memref<1x128xf32, #tpu.memory_space<vmem>>, vector<1x128xf32>
    %15 = vector.shape_cast %14 : vector<1x128xf32> to vector<1x128xf32>
    %16 = vector.broadcast %15 : vector<1x128xf32> to vector<8x128xf32>
    %c0_13 = arith.constant 0 : index
    %c0_14 = arith.constant 0 : index
    %17 = vector.load %arg13[%c0_13, %c0_14] : memref<8x128xf32, #tpu.memory_space<vmem>>, vector<8x128xf32>
    %c0_i32_15 = arith.constant 0 : i32
    %c8_i32 = arith.constant 8 : i32
    %18 = arith.addi %c0_i32_15, %c8_i32 : i32
    %c1_i32 = arith.constant 1 : i32
    %19 = scf.for %arg15 = %c0_i32_15 to %18 step %c1_i32 iter_args(%arg16 = %17) -> (vector<8x128xf32>)  : i32 {
      %c8_i32_29 = arith.constant 8 : i32
      %30 = arith.muli %arg15, %c8_i32_29 : i32
      %31 = tpu.assume_multiple %30, 8 : i32
      %32 = arith.index_cast %31 : i32 to index
      %c0_30 = arith.constant 0 : index
      %33 = vector.load %arg14[%32, %c0_30] : memref<64x128xf32, #tpu.memory_space<vmem>>, vector<8x128xf32>
      %c0_31 = arith.constant 0 : index
      %34 = arith.index_cast %31 : i32 to index
      %c0_32 = arith.constant 0 : index
      %35 = vector.load %arg4[%c0_31, %34, %c0_32] : memref<1x64x1xf32, #tpu.memory_space<vmem>>, vector<1x8x1xf32>
      %36 = vector.shape_cast %35 : vector<1x8x1xf32> to vector<8x1xf32>
      %37 = vector.shape_cast %36 : vector<8x1xf32> to vector<8x1xf32>
      %38 = vector.broadcast %37 : vector<8x1xf32> to vector<8x128xf32>
      %39 = arith.mulf %38, %13 : vector<8x128xf32>
      %40 = arith.mulf %38, %16 : vector<8x128xf32>
      %cst_33 = arith.constant 1.000000e+00 : f32
      %41 = vector.broadcast %cst_33 : f32 to vector<8x128xf32>
      %42 = arith.addf %41, %40 : vector<8x128xf32>
      %c0_i32_34 = arith.constant 0 : i32
      %c0_35 = arith.constant 0 : index
      %c0_36 = arith.constant 0 : index
      %43 = vector.load %arg5[%c0_35, %c0_36] : memref<128x128xf32, #tpu.memory_space<vmem>>, vector<128x128xf32>
      %cst_37 = arith.constant dense<0.000000e+00> : vector<8x128xf32>
      %44 = tpu.matmul %arg16, %43, %cst_37 {dimension_numbers = #tpu.dot_dimension_numbers<[1], [0], [0], [1], [0, 0, 1, 1], [], []>} : vector<8x128xf32>, vector<128x128xf32>, vector<8x128xf32> -> vector<8x128xf32>
      %45 = arith.addf %44, %33 : vector<8x128xf32>
      %46 = math.tanh %45 : vector<8x128xf32>
      %47 = arith.mulf %39, %46 : vector<8x128xf32>
      %48 = arith.addf %arg16, %47 : vector<8x128xf32>
      %49 = arith.mulf %38, %46 : vector<8x128xf32>
      %50 = arith.addf %42, %49 : vector<8x128xf32>
      %51 = tpu.reciprocal %50 {approx = true} : vector<8x128xf32> -> vector<8x128xf32>
      %52 = arith.mulf %50, %51 : vector<8x128xf32>
      %cst_38 = arith.constant 2.000000e+00 : f32
      %53 = vector.broadcast %cst_38 : f32 to vector<8x128xf32>
      %54 = arith.subf %53, %52 : vector<8x128xf32>
      %55 = arith.mulf %51, %54 : vector<8x128xf32>
      %56 = arith.mulf %48, %55 : vector<8x128xf32>
      %c1_i32_39 = arith.constant 1 : i32
      %c0_40 = arith.constant 0 : index
      %c0_41 = arith.constant 0 : index
      %57 = vector.load %arg5[%c0_40, %c0_41] : memref<128x128xf32, #tpu.memory_space<vmem>>, vector<128x128xf32>
      %cst_42 = arith.constant dense<0.000000e+00> : vector<8x128xf32>
      %58 = tpu.matmul %56, %57, %cst_42 {dimension_numbers = #tpu.dot_dimension_numbers<[1], [0], [0], [1], [0, 0, 1, 1], [], []>} : vector<8x128xf32>, vector<128x128xf32>, vector<8x128xf32> -> vector<8x128xf32>
      %59 = arith.addf %58, %33 : vector<8x128xf32>
      %60 = math.tanh %59 : vector<8x128xf32>
      %61 = arith.mulf %39, %60 : vector<8x128xf32>
      %62 = arith.addf %56, %61 : vector<8x128xf32>
      %63 = arith.mulf %38, %60 : vector<8x128xf32>
      %64 = arith.addf %42, %63 : vector<8x128xf32>
      %65 = tpu.reciprocal %64 {approx = true} : vector<8x128xf32> -> vector<8x128xf32>
      %66 = arith.mulf %64, %65 : vector<8x128xf32>
      %cst_43 = arith.constant 2.000000e+00 : f32
      %67 = vector.broadcast %cst_43 : f32 to vector<8x128xf32>
      %68 = arith.subf %67, %66 : vector<8x128xf32>
      %69 = arith.mulf %65, %68 : vector<8x128xf32>
      %70 = arith.mulf %62, %69 : vector<8x128xf32>
      %c2_i32 = arith.constant 2 : i32
      %c0_44 = arith.constant 0 : index
      %c0_45 = arith.constant 0 : index
      %71 = vector.load %arg5[%c0_44, %c0_45] : memref<128x128xf32, #tpu.memory_space<vmem>>, vector<128x128xf32>
      %cst_46 = arith.constant dense<0.000000e+00> : vector<8x128xf32>
      %72 = tpu.matmul %70, %71, %cst_46 {dimension_numbers = #tpu.dot_dimension_numbers<[1], [0], [0], [1], [0, 0, 1, 1], [], []>} : vector<8x128xf32>, vector<128x128xf32>, vector<8x128xf32> -> vector<8x128xf32>
      %73 = arith.addf %72, %33 : vector<8x128xf32>
      %74 = math.tanh %73 : vector<8x128xf32>
      %75 = arith.mulf %39, %74 : vector<8x128xf32>
      %76 = arith.addf %70, %75 : vector<8x128xf32>
      %77 = arith.mulf %38, %74 : vector<8x128xf32>
      %78 = arith.addf %42, %77 : vector<8x128xf32>
      %79 = tpu.reciprocal %78 {approx = true} : vector<8x128xf32> -> vector<8x128xf32>
      %80 = arith.mulf %78, %79 : vector<8x128xf32>
      %cst_47 = arith.constant 2.000000e+00 : f32
      %81 = vector.broadcast %cst_47 : f32 to vector<8x128xf32>
      %82 = arith.subf %81, %80 : vector<8x128xf32>
      %83 = arith.mulf %79, %82 : vector<8x128xf32>
      %84 = arith.mulf %76, %83 : vector<8x128xf32>
      %c3_i32 = arith.constant 3 : i32
      %c0_48 = arith.constant 0 : index
      %c0_49 = arith.constant 0 : index
      %85 = vector.load %arg5[%c0_48, %c0_49] : memref<128x128xf32, #tpu.memory_space<vmem>>, vector<128x128xf32>
      %cst_50 = arith.constant dense<0.000000e+00> : vector<8x128xf32>
      %86 = tpu.matmul %84, %85, %cst_50 {dimension_numbers = #tpu.dot_dimension_numbers<[1], [0], [0], [1], [0, 0, 1, 1], [], []>} : vector<8x128xf32>, vector<128x128xf32>, vector<8x128xf32> -> vector<8x128xf32>
      %87 = arith.addf %86, %33 : vector<8x128xf32>
      %88 = math.tanh %87 : vector<8x128xf32>
      %89 = arith.mulf %39, %88 : vector<8x128xf32>
      %90 = arith.addf %84, %89 : vector<8x128xf32>
      %91 = arith.mulf %38, %88 : vector<8x128xf32>
      %92 = arith.addf %42, %91 : vector<8x128xf32>
      %93 = tpu.reciprocal %92 {approx = true} : vector<8x128xf32> -> vector<8x128xf32>
      %94 = arith.mulf %92, %93 : vector<8x128xf32>
      %cst_51 = arith.constant 2.000000e+00 : f32
      %95 = vector.broadcast %cst_51 : f32 to vector<8x128xf32>
      %96 = arith.subf %95, %94 : vector<8x128xf32>
      %97 = arith.mulf %93, %96 : vector<8x128xf32>
      %98 = arith.mulf %90, %97 : vector<8x128xf32>
      %c4_i32 = arith.constant 4 : i32
      %c0_52 = arith.constant 0 : index
      %c0_53 = arith.constant 0 : index
      %99 = vector.load %arg5[%c0_52, %c0_53] : memref<128x128xf32, #tpu.memory_space<vmem>>, vector<128x128xf32>
      %cst_54 = arith.constant dense<0.000000e+00> : vector<8x128xf32>
      %100 = tpu.matmul %98, %99, %cst_54 {dimension_numbers = #tpu.dot_dimension_numbers<[1], [0], [0], [1], [0, 0, 1, 1], [], []>} : vector<8x128xf32>, vector<128x128xf32>, vector<8x128xf32> -> vector<8x128xf32>
      %101 = arith.addf %100, %33 : vector<8x128xf32>
      %102 = math.tanh %101 : vector<8x128xf32>
      %103 = arith.mulf %39, %102 : vector<8x128xf32>
      %104 = arith.addf %98, %103 : vector<8x128xf32>
      %105 = arith.mulf %38, %102 : vector<8x128xf32>
      %106 = arith.addf %42, %105 : vector<8x128xf32>
      %107 = tpu.reciprocal %106 {approx = true} : vector<8x128xf32> -> vector<8x128xf32>
      %108 = arith.mulf %106, %107 : vector<8x128xf32>
      %cst_55 = arith.constant 2.000000e+00 : f32
      %109 = vector.broadcast %cst_55 : f32 to vector<8x128xf32>
      %110 = arith.subf %109, %108 : vector<8x128xf32>
      %111 = arith.mulf %107, %110 : vector<8x128xf32>
      %112 = arith.mulf %104, %111 : vector<8x128xf32>
      %c5_i32 = arith.constant 5 : i32
      %c0_56 = arith.constant 0 : index
      %c0_57 = arith.constant 0 : index
      %113 = vector.load %arg5[%c0_56, %c0_57] : memref<128x128xf32, #tpu.memory_space<vmem>>, vector<128x128xf32>
      %cst_58 = arith.constant dense<0.000000e+00> : vector<8x128xf32>
      %114 = tpu.matmul %112, %113, %cst_58 {dimension_numbers = #tpu.dot_dimension_numbers<[1], [0], [0], [1], [0, 0, 1, 1], [], []>} : vector<8x128xf32>, vector<128x128xf32>, vector<8x128xf32> -> vector<8x128xf32>
      %115 = arith.addf %114, %33 : vector<8x128xf32>
      %116 = math.tanh %115 : vector<8x128xf32>
      %117 = arith.mulf %39, %116 : vector<8x128xf32>
      %118 = arith.addf %112, %117 : vector<8x128xf32>
      %119 = arith.mulf %38, %116 : vector<8x128xf32>
      %120 = arith.addf %42, %119 : vector<8x128xf32>
      %121 = tpu.reciprocal %120 {approx = true} : vector<8x128xf32> -> vector<8x128xf32>
      %122 = arith.mulf %120, %121 : vector<8x128xf32>
      %cst_59 = arith.constant 2.000000e+00 : f32
      %123 = vector.broadcast %cst_59 : f32 to vector<8x128xf32>
      %124 = arith.subf %123, %122 : vector<8x128xf32>
      %125 = arith.mulf %121, %124 : vector<8x128xf32>
      %126 = arith.mulf %118, %125 : vector<8x128xf32>
      %127 = arith.index_cast %31 : i32 to index
      %c0_60 = arith.constant 0 : index
      %128 = vector.load %arg14[%127, %c0_60] : memref<64x128xf32, #tpu.memory_space<vmem>>, vector<8x128xf32>
      tpu.vector_store %arg14[%127, %c0_60], %126 {strides = array<i32>} : memref<64x128xf32, #tpu.memory_space<vmem>>, vector<8x128xf32>,
      scf.yield %126 : vector<8x128xf32>
    }
    %c8_i32_16 = arith.constant 8 : i32
    %c0_17 = arith.constant 0 : index
    %c0_18 = arith.constant 0 : index
    %20 = vector.load %arg13[%c0_17, %c0_18] : memref<8x128xf32, #tpu.memory_space<vmem>>, vector<8x128xf32>
    tpu.vector_store %arg13[%c0_17, %c0_18], %19 {strides = array<i32>} : memref<8x128xf32, #tpu.memory_space<vmem>>, vector<8x128xf32>,
    %c0_19 = arith.constant 0 : index
    %c0_20 = arith.constant 0 : index
    %21 = vector.load %arg14[%c0_19, %c0_20] : memref<64x128xf32, #tpu.memory_space<vmem>>, vector<64x128xf32>
    %c0_21 = arith.constant 0 : index
    %c0_22 = arith.constant 0 : index
    %22 = vector.load %arg10[%c0_21, %c0_22] : memref<128x128xf32, #tpu.memory_space<vmem>>, vector<128x128xf32>
    %cst_23 = arith.constant dense<0.000000e+00> : vector<64x128xf32>
    %23 = tpu.matmul %21, %22, %cst_23 {dimension_numbers = #tpu.dot_dimension_numbers<[1], [0], [0], [1], [0, 0, 1, 1], [], []>} : vector<64x128xf32>, vector<128x128xf32>, vector<64x128xf32> -> vector<64x128xf32>
    %c0_24 = arith.constant 0 : index
    %c0_25 = arith.constant 0 : index
    %24 = vector.load %arg11[%c0_24, %c0_25] : memref<1x128xf32, #tpu.memory_space<vmem>>, vector<1x128xf32>
    %25 = vector.broadcast %24 : vector<1x128xf32> to vector<64x128xf32>
    %26 = arith.addf %23, %25 : vector<64x128xf32>
    %c0_26 = arith.constant 0 : index
    %c0_27 = arith.constant 0 : index
    %c0_28 = arith.constant 0 : index
    %27 = vector.load %arg12[%c0_26, %c0_27, %c0_28] : memref<1x64x128xf32, #tpu.memory_space<vmem>>, vector<1x64x128xf32>
    %28 = vector.shape_cast %27 : vector<1x64x128xf32> to vector<64x128xf32>
    %29 = vector.shape_cast %26 : vector<64x128xf32> to vector<1x64x128xf32>
    tpu.vector_store %arg12[%c0_26, %c0_27, %c0_28], %29 {strides = array<i32>} : memref<1x64x128xf32, #tpu.memory_space<vmem>>, vector<1x64x128xf32>,
    return
  }
  func.func @transform_0(%arg0: i32, %arg1: i32) -> (i32, i32, i32) {
    %c0_i32 = arith.constant 0 : i32
    %c0_i32_0 = arith.constant 0 : i32
    %c0_i32_1 = arith.constant 0 : i32
    return %arg0, %c0_i32, %c0_i32_0 : i32, i32, i32
  }
  func.func @transform_1(%arg0: i32, %arg1: i32) -> (i32, i32, i32) {
    %c0_i32 = arith.constant 0 : i32
    %c0_i32_0 = arith.constant 0 : i32
    return %arg0, %arg1, %c0_i32 : i32, i32, i32
  }
  func.func @transform_2(%arg0: i32, %arg1: i32) -> (i32, i32, i32) {
    %c0_i32 = arith.constant 0 : i32
    %c0_i32_0 = arith.constant 0 : i32
    return %arg0, %arg1, %c0_i32 : i32, i32, i32
  }
  func.func @transform_3(%arg0: i32, %arg1: i32) -> (i32, i32) {
    %c0_i32 = arith.constant 0 : i32
    %c0_i32_0 = arith.constant 0 : i32
    %c0_i32_1 = arith.constant 0 : i32
    return %c0_i32, %c0_i32_0 : i32, i32
  }
  func.func @transform_4(%arg0: i32, %arg1: i32) -> (i32, i32) {
    %c0_i32 = arith.constant 0 : i32
    %c0_i32_0 = arith.constant 0 : i32
    %c0_i32_1 = arith.constant 0 : i32
    return %c0_i32, %c0_i32_0 : i32, i32
  }
  func.func @transform_5(%arg0: i32, %arg1: i32) -> (i32, i32) {
    %c0_i32 = arith.constant 0 : i32
    %c0_i32_0 = arith.constant 0 : i32
    %c0_i32_1 = arith.constant 0 : i32
    return %c0_i32, %c0_i32_0 : i32, i32
  }
  func.func @transform_6(%arg0: i32, %arg1: i32) -> (i32, i32) {
    %c0_i32 = arith.constant 0 : i32
    %c0_i32_0 = arith.constant 0 : i32
    %c0_i32_1 = arith.constant 0 : i32
    return %c0_i32, %c0_i32_0 : i32, i32
  }
  func.func @transform_7(%arg0: i32, %arg1: i32) -> (i32, i32) {
    %c0_i32 = arith.constant 0 : i32
    %c0_i32_0 = arith.constant 0 : i32
    %c0_i32_1 = arith.constant 0 : i32
    return %c0_i32, %c0_i32_0 : i32, i32
  }
  func.func @transform_8(%arg0: i32, %arg1: i32) -> (i32, i32) {
    %c0_i32 = arith.constant 0 : i32
    %c0_i32_0 = arith.constant 0 : i32
    %c0_i32_1 = arith.constant 0 : i32
    return %c0_i32, %c0_i32_0 : i32, i32
  }
  func.func @transform_9(%arg0: i32, %arg1: i32) -> (i32, i32) {
    %c0_i32 = arith.constant 0 : i32
    %c0_i32_0 = arith.constant 0 : i32
    %c0_i32_1 = arith.constant 0 : i32
    return %c0_i32, %c0_i32_0 : i32, i32
  }
  func.func @transform_10(%arg0: i32, %arg1: i32) -> (i32, i32, i32) {
    %c0_i32 = arith.constant 0 : i32
    %c0_i32_0 = arith.constant 0 : i32
    return %arg0, %arg1, %c0_i32 : i32, i32, i32
  }
}

</mosaic_0001>

<llo_original>
// kernel: tpu_custom_call.1
$region0: #{tpu_custom_call.1}
  #allocation0 [shape = 'u32[]', space=smem, size = 0x4, offset = 0x4, fixed_abs, tag = 'smem constant byte address 0x4 - core index']
  #allocation1 [shape = 'u32[72,128]{1,0:T(1,128)}', space=vmem, size = 0x9000, scoped, tag = 'internal scratch']
  #allocation2 [shape = 'f32[8,128]{1,0:T(8,128)}', space=vmem, size = 0x1000, scoped, tag = 'scratch operand']
  #allocation3 [shape = 'f32[64,128]{1,0:T(8,128)}', space=vmem, size = 0x8000, scoped, tag = 'scratch operand']
  %s0 = inlined_call_operand.hbm [shape: f32[2,8,128], index: 0, kind: input, shape index: {}]
  %s1 = inlined_call_operand.vmem [shape: f32[2,128,128], index: 1, kind: input, shape index: {}]
  %s2 = inlined_call_operand.vmem [shape: f32[2,128,1], index: 2, kind: input, shape index: {}]
  %s3 = inlined_call_operand.hbm [shape: f32[128,128], index: 3, kind: input, shape index: {}]
  %s4 = inlined_call_operand.hbm [shape: f32[128,128], index: 4, kind: input, shape index: {}]
  %s5 = inlined_call_operand.vmem [shape: f32[1,128], index: 5, kind: input, shape index: {}]
  %s6 = inlined_call_operand.vmem [shape: f32[1,128], index: 6, kind: input, shape index: {}]
  %s7 = inlined_call_operand.vmem [shape: f32[1,128], index: 7, kind: input, shape index: {}]
  %s8 = inlined_call_operand.hbm [shape: f32[128,128], index: 8, kind: input, shape index: {}]
  %s9 = inlined_call_operand.vmem [shape: f32[1,128], index: 9, kind: input, shape index: {}]
  %s10 = inlined_call_operand.hbm [shape: f32[2,128,128], index: 10, kind: output, shape index: {}]
  %s11 = sld [smem:[#allocation0]]
  $region100: #{tpu_custom_call.1} parent=0
    _
  %s13 = ssub.s32 1, %s11
  %s14 = scalar_select 0, %s13, %s11
  $region1: #{tpu_custom_call.1} parent=0
    #allocation4 [shape = 'u8[8192]{0}', space=vmem, size = 0x2000, scoped, tag = 'input window, operand 0']
    #allocation5 [shape = 's32[2]{0}', space=sflag, size = 0x8, scoped, tag = 'scoped memory for tpu_custom_call.1']
    #allocation6 [shape = 's32[2]{0}', space=sflag, size = 0x8, scoped, tag = 'scoped memory for tpu_custom_call.1']
    #allocation7 [shape = 'u8[65536]{0}', space=vmem, size = 0x10000, scoped, tag = 'input window, operand 3, single buffered']
    #allocation8 [shape = 's32[1]{0}', space=sflag, size = 0x4, scoped, tag = 'scoped memory for tpu_custom_call.1']
    #allocation9 [shape = 'u8[65536]{0}', space=vmem, size = 0x10000, scoped, tag = 'input window, operand 4, single buffered']
    #allocation10 [shape = 'u8[65536]{0}', space=vmem, size = 0x10000, scoped, tag = 'input window, operand 8, single buffered']
    #allocation11 [shape = 's32[1]{0}', space=sflag, size = 0x4, scoped, tag = 'scoped memory for tpu_custom_call.1']
    #allocation12 [shape = 'u8[65536]{0}', space=vmem, size = 0x10000, scoped, tag = 'output window, operand 0']
    %15 = vsyncpa [#allocation5], 0
    %s16 = scalar_lea.sflag [#allocation5], 1
    %17 = vsyncpa %s16, 0
    %18 = vsyncpa [#allocation8], 0
    %19 = vsyncpa [#allocation11], 0
    %20 = vsyncpa [#allocation6], 0
    %s21 = scalar_lea.sflag [#allocation6], 1
    %22 = vsyncpa %s21, 0
    loop: start=0, step=1, limit=6
    $region2: #{tpu_custom_call.1} parent=1 // loop_pre_header
      _
    $region3: #{tpu_custom_call.1} parent=1 // loop_header
      %s24 = sphi 0, %s28
      %p25 = scmp.ge.s32.totalorder %s24, 6
      %s31 = sphi 0, %s43
      %s32 = sphi 0, %s39
      %s33 = sphi 0, %s31
      %s34 = sphi 0, %s32
      %s35 = sphi 0, %s33
      %s36 = sphi 0, %s34
      %s46 = sphi 0, %s48
      %s49 = sphi 0, %s46
      %s50 = sphi 0, %s49
      %s66 = sphi 0, %s50
      %s74 = sphi 0, %s76
      %s77 = sphi 0, %s74
      %s78 = sphi 0, %s77
      %s94 = sphi 0, %s78
      %s102 = sphi 0, %s104
      %s105 = sphi 0, %s102
      %s106 = sphi 0, %s105
      %s122 = sphi 0, %s106
      %s126 = sphi 0, %s126
      %s128 = sphi 0, %s126
      %s129 = sphi 0, %s128
      %s143 = sphi 0, %s129
      %s147 = sphi 0, %s147
      %s149 = sphi 0, %s147
      %s150 = sphi 0, %s149
      %s164 = sphi 0, %s150
      %s168 = sphi 0, %s168
      %s170 = sphi 0, %s168
      %s171 = sphi 0, %s170
      %s185 = sphi 0, %s171
      %s189 = sphi 0, %s189
      %s191 = sphi 0, %s189
      %s192 = sphi 0, %s191
      %s206 = sphi 0, %s192
      %s210 = sphi 0, %s210
      %s212 = sphi 0, %s210
      %s213 = sphi 0, %s212
      %s227 = sphi 0, %s213
      %s231 = sphi 0, %s231
      %s233 = sphi 0, %s231
      %s234 = sphi 0, %s233
      %s248 = sphi 0, %s234
      %s252 = sphi 0, %s252
      %s254 = sphi 0, %s252
      %s255 = sphi 0, %s254
      %s269 = sphi 0, %s255
      %s277 = sphi 0, %s279
      %s280 = sphi 0, %s277
      %s281 = sphi 0, %s280
      %s297 = sphi 0, %s281
    $region4: #{tpu_custom_call.1} parent=1 // loop_header_branch
      %27 = sbr.rel (%p25) target = $region8
    $region5: #{tpu_custom_call.1} parent=1 // loop_body
      %s29 = ssub.s32 %s24, 1
      %s30 = ssub.s32 %s24, 2
      %s37 = sadd.s32 1, %s32
      %p38 = scmp.ge.s32.totalorder %s37, 2
      %s39 = scalar_select %p38, 0, %s37
      %s40 = sadd.s32 1, %s31
      %s41 = scalar_select %p38, %s40, %s31
      %p42 = scmp.ge.s32.totalorder %s41, 2
      %s43 = scalar_select %p42, 0, %s41
      %s44 = ssub.s32 %s31, %s43
      %p45 = scmp.eq.s32.totalorder %s44, 0
      %s47 = sadd.s32 %s46, 1
      %s48 = scalar_select %p45, %s46, %s47
      %p51 = pneg %p45
      %p52 = scmp.eq.s32.totalorder %s24, 3
      %p53 = por %p51, %p52
      %p54 = scmp.ne.s32.totalorder %s46, %s49
      %p55 = scmp.eq.s32.totalorder %s24, 0
      %p56 = por %p54, %p55
      %p57 = scmp.ne.s32.totalorder %s46, %s49
      %p58 = scmp.eq.s32.totalorder %s29, 3
      %p59 = por %p57, %p58
      %p60 = scmp.ne.s32.totalorder %s49, %s50
      %p61 = scmp.eq.s32.totalorder %s29, 0
      %p62 = por %p60, %p61
      %p63 = scmp.ne.s32.totalorder %s49, %s50
      %p64 = scmp.eq.s32.totalorder %s30, 3
      %p65 = por %p63, %p64
      %p67 = scmp.ne.s32.totalorder %s50, %s66
      %p68 = scmp.eq.s32.totalorder %s30, 0
      %p69 = por %p67, %p68
      %s70 = ssub.s32 %s31, %s43
      %s71 = ssub.s32 %s32, %s39
      %s72 = sor.u32 %s70, %s71
      %p73 = scmp.eq.s32.totalorder %s72, 0
      %s75 = sadd.s32 %s74, 1
      %s76 = scalar_select %p73, %s74, %s75
      %p79 = pneg %p73
      %p80 = scmp.eq.s32.totalorder %s24, 3
      %p81 = por %p79, %p80
      %p82 = scmp.ne.s32.totalorder %s74, %s77
      %p83 = scmp.eq.s32.totalorder %s24, 0
      %p84 = por %p82, %p83
      %p85 = scmp.ne.s32.totalorder %s74, %s77
      %p86 = scmp.eq.s32.totalorder %s29, 3
      %p87 = por %p85, %p86
      %p88 = scmp.ne.s32.totalorder %s77, %s78
      %p89 = scmp.eq.s32.totalorder %s29, 0
      %p90 = por %p88, %p89
      %p91 = scmp.ne.s32.totalorder %s77, %s78
      %p92 = scmp.eq.s32.totalorder %s30, 3
      %p93 = por %p91, %p92
      %p95 = scmp.ne.s32.totalorder %s78, %s94
      %p96 = scmp.eq.s32.totalorder %s30, 0
      %p97 = por %p95, %p96
      %s98 = ssub.s32 %s31, %s43
      %s99 = ssub.s32 %s32, %s39
      %s100 = sor.u32 %s98, %s99
      %p101 = scmp.eq.s32.totalorder %s100, 0
      %s103 = sadd.s32 %s102, 1
      %s104 = scalar_select %p101, %s102, %s103
      %p107 = pneg %p101
      %p108 = scmp.eq.s32.totalorder %s24, 3
      %p109 = por %p107, %p108
      %p110 = scmp.ne.s32.totalorder %s102, %s105
      %p111 = scmp.eq.s32.totalorder %s24, 0
      %p112 = por %p110, %p111
      %p113 = scmp.ne.s32.totalorder %s102, %s105
      %p114 = scmp.eq.s32.totalorder %s29, 3
      %p115 = por %p113, %p114
      %p116 = scmp.ne.s32.totalorder %s105, %s106
      %p117 = scmp.eq.s32.totalorder %s29, 0
      %p118 = por %p116, %p117
      %p119 = scmp.ne.s32.totalorder %s105, %s106
      %p120 = scmp.eq.s32.totalorder %s30, 3
      %p121 = por %p119, %p120
      %p123 = scmp.ne.s32.totalorder %s106, %s122
      %p124 = scmp.eq.s32.totalorder %s30, 0
      %p125 = por %p123, %p124
      %s127 = sadd.s32 %s126, 1
      %p130 = scmp.eq.s32.totalorder %s24, 3
      %p131 = scmp.ne.s32.totalorder %s126, %s128
      %p132 = scmp.eq.s32.totalorder %s24, 0
      %p133 = por %p131, %p132
      %p134 = scmp.ne.s32.totalorder %s126, %s128
      %p135 = scmp.eq.s32.totalorder %s29, 3
      %p136 = por %p134, %p135
      %p137 = scmp.ne.s32.totalorder %s128, %s129
      %p138 = scmp.eq.s32.totalorder %s29, 0
      %p139 = por %p137, %p138
      %p140 = scmp.ne.s32.totalorder %s128, %s129
      %p141 = scmp.eq.s32.totalorder %s30, 3
      %p142 = por %p140, %p141
      %p144 = scmp.ne.s32.totalorder %s129, %s143
      %p145 = scmp.eq.s32.totalorder %s30, 0
      %p146 = por %p144, %p145
      %s148 = sadd.s32 %s147, 1
      %p151 = scmp.eq.s32.totalorder %s24, 3
      %p152 = scmp.ne.s32.totalorder %s147, %s149
      %p153 = scmp.eq.s32.totalorder %s24, 0
      %p154 = por %p152, %p153
      %p155 = scmp.ne.s32.totalorder %s147, %s149
      %p156 = scmp.eq.s32.totalorder %s29, 3
      %p157 = por %p155, %p156
      %p158 = scmp.ne.s32.totalorder %s149, %s150
      %p159 = scmp.eq.s32.totalorder %s29, 0
      %p160 = por %p158, %p159
      %p161 = scmp.ne.s32.totalorder %s149, %s150
      %p162 = scmp.eq.s32.totalorder %s30, 3
      %p163 = por %p161, %p162
      %p165 = scmp.ne.s32.totalorder %s150, %s164
      %p166 = scmp.eq.s32.totalorder %s30, 0
      %p167 = por %p165, %p166
      %s169 = sadd.s32 %s168, 1
      %p172 = scmp.eq.s32.totalorder %s24, 3
      %p173 = scmp.ne.s32.totalorder %s168, %s170
      %p174 = scmp.eq.s32.totalorder %s24, 0
      %p175 = por %p173, %p174
      %p176 = scmp.ne.s32.totalorder %s168, %s170
      %p177 = scmp.eq.s32.totalorder %s29, 3
      %p178 = por %p176, %p177
      %p179 = scmp.ne.s32.totalorder %s170, %s171
      %p180 = scmp.eq.s32.totalorder %s29, 0
      %p181 = por %p179, %p180
      %p182 = scmp.ne.s32.totalorder %s170, %s171
      %p183 = scmp.eq.s32.totalorder %s30, 3
      %p184 = por %p182, %p183
      %p186 = scmp.ne.s32.totalorder %s171, %s185
      %p187 = scmp.eq.s32.totalorder %s30, 0
      %p188 = por %p186, %p187
      %s190 = sadd.s32 %s189, 1
      %p193 = scmp.eq.s32.totalorder %s24, 3
      %p194 = scmp.ne.s32.totalorder %s189, %s191
      %p195 = scmp.eq.s32.totalorder %s24, 0
      %p196 = por %p194, %p195
      %p197 = scmp.ne.s32.totalorder %s189, %s191
      %p198 = scmp.eq.s32.totalorder %s29, 3
      %p199 = por %p197, %p198
      %p200 = scmp.ne.s32.totalorder %s191, %s192
      %p201 = scmp.eq.s32.totalorder %s29, 0
      %p202 = por %p200, %p201
      %p203 = scmp.ne.s32.totalorder %s191, %s192
      %p204 = scmp.eq.s32.totalorder %s30, 3
      %p205 = por %p203, %p204
      %p207 = scmp.ne.s32.totalorder %s192, %s206
      %p208 = scmp.eq.s32.totalorder %s30, 0
      %p209 = por %p207, %p208
      %s211 = sadd.s32 %s210, 1
      %p214 = scmp.eq.s32.totalorder %s24, 3
      %p215 = scmp.ne.s32.totalorder %s210, %s212
      %p216 = scmp.eq.s32.totalorder %s24, 0
      %p217 = por %p215, %p216
      %p218 = scmp.ne.s32.totalorder %s210, %s212
      %p219 = scmp.eq.s32.totalorder %s29, 3
      %p220 = por %p218, %p219
      %p221 = scmp.ne.s32.totalorder %s212, %s213
      %p222 = scmp.eq.s32.totalorder %s29, 0
      %p223 = por %p221, %p222
      %p224 = scmp.ne.s32.totalorder %s212, %s213
      %p225 = scmp.eq.s32.totalorder %s30, 3
      %p226 = por %p224, %p225
      %p228 = scmp.ne.s32.totalorder %s213, %s227
      %p229 = scmp.eq.s32.totalorder %s30, 0
      %p230 = por %p228, %p229
      %s232 = sadd.s32 %s231, 1
      %p235 = scmp.eq.s32.totalorder %s24, 3
      %p236 = scmp.ne.s32.totalorder %s231, %s233
      %p237 = scmp.eq.s32.totalorder %s24, 0
      %p238 = por %p236, %p237
      %p239 = scmp.ne.s32.totalorder %s231, %s233
      %p240 = scmp.eq.s32.totalorder %s29, 3
      %p241 = por %p239, %p240
      %p242 = scmp.ne.s32.totalorder %s233, %s234
      %p243 = scmp.eq.s32.totalorder %s29, 0
      %p244 = por %p242, %p243
      %p245 = scmp.ne.s32.totalorder %s233, %s234
      %p246 = scmp.eq.s32.totalorder %s30, 3
      %p247 = por %p245, %p246
      %p249 = scmp.ne.s32.totalorder %s234, %s248
      %p250 = scmp.eq.s32.totalorder %s30, 0
      %p251 = por %p249, %p250
      %s253 = sadd.s32 %s252, 1
      %p256 = scmp.eq.s32.totalorder %s24, 3
      %p257 = scmp.ne.s32.totalorder %s252, %s254
      %p258 = scmp.eq.s32.totalorder %s24, 0
      %p259 = por %p257, %p258
      %p260 = scmp.ne.s32.totalorder %s252, %s254
      %p261 = scmp.eq.s32.totalorder %s29, 3
      %p262 = por %p260, %p261
      %p263 = scmp.ne.s32.totalorder %s254, %s255
      %p264 = scmp.eq.s32.totalorder %s29, 0
      %p265 = por %p263, %p264
      %p266 = scmp.ne.s32.totalorder %s254, %s255
      %p267 = scmp.eq.s32.totalorder %s30, 3
      %p268 = por %p266, %p267
      %p270 = scmp.ne.s32.totalorder %s255, %s269
      %p271 = scmp.eq.s32.totalorder %s30, 0
      %p272 = por %p270, %p271
      %s273 = ssub.s32 %s31, %s43
      %s274 = ssub.s32 %s32, %s39
      %s275 = sor.u32 %s273, %s274
      %p276 = scmp.eq.s32.totalorder %s275, 0
      %s278 = sadd.s32 %s277, 1
      %s279 = scalar_select %p276, %s277, %s278
      %p282 = pneg %p276
      %p283 = scmp.eq.s32.totalorder %s24, 3
      %p284 = por %p282, %p283
      %p285 = scmp.ne.s32.totalorder %s277, %s280
      %p286 = scmp.eq.s32.totalorder %s24, 0
      %p287 = por %p285, %p286
      %p288 = scmp.ne.s32.totalorder %s277, %s280
      %p289 = scmp.eq.s32.totalorder %s29, 3
      %p290 = por %p288, %p289
      %p291 = scmp.ne.s32.totalorder %s280, %s281
      %p292 = scmp.eq.s32.totalorder %s29, 0
      %p293 = por %p291, %p292
      %p294 = scmp.ne.s32.totalorder %s280, %s281
      %p295 = scmp.eq.s32.totalorder %s30, 3
      %p296 = por %p294, %p295
      %p298 = scmp.ne.s32.totalorder %s281, %s297
      %p299 = scmp.eq.s32.totalorder %s30, 0
      %p300 = por %p298, %p299
      %p301 = scmp.le.s32.totalorder 1, %s24
      %p302 = scmp.lt.s32.totalorder %s24, 5
      %p303 = pnand %p301, %p302
      %p304 = pneg %p303
      // Predicated region
      $region9: #{tpu_custom_call.1} parent=5 // pred_check
        _
      $region10: #{tpu_custom_call.1} parent=5 // pred_check_branch
        %306 = sbr.rel (%p303) target = $region12
      $region11: #{tpu_custom_call.1} parent=5 // pred_region
        %s307 = ssub.s32 %s24, 1
        // Predicated region
        $region13: #{tpu_custom_call.1} parent=11 // pred_check
          %p308 = pneg %p139
        $region14: #{tpu_custom_call.1} parent=11 // pred_check_branch
          %310 = sbr.rel (%p308) target = $region16
        $region15: #{tpu_custom_call.1} parent=11 // pred_region
          %312 = vsyncadd [#allocation8], 0
          %s313 = sshll.u32 %s3, 4
          %s314 = int_to_ptr.hbm [resolvable:$true] %s313
          %s315 = sshll.u32 [#allocation7], 4
          %s316 = int_to_ptr.vmem [resolvable:$true] %s315
          %321 = dma.hbm_to_vmem [thread:$0]  %s314, 2048, %s316, [#allocation8], 128, 128, 8
        $region16: #{tpu_custom_call.1} parent=11 // pred_fallthru
          _
        // Predicated region
        $region17: #{tpu_custom_call.1} parent=11 // pred_check
          %p322 = pneg %p160
        $region18: #{tpu_custom_call.1} parent=11 // pred_check_branch
          %324 = sbr.rel (%p322) target = $region20
        $region19: #{tpu_custom_call.1} parent=11 // pred_region
          %326 = vsyncadd [#allocation8], 0
          %s327 = sshll.u32 %s4, 4
          %s328 = int_to_ptr.hbm [resolvable:$true] %s327
          %s329 = sshll.u32 [#allocation9], 4
          %s330 = int_to_ptr.vmem [resolvable:$true] %s329
          %335 = dma.hbm_to_vmem [thread:$0]  %s328, 2048, %s330, [#allocation8], 128, 128, 8
        $region20: #{tpu_custom_call.1} parent=11 // pred_fallthru
          _
        // Predicated region
        $region21: #{tpu_custom_call.1} parent=11 // pred_check
          %p336 = pneg %p181
        $region22: #{tpu_custom_call.1} parent=11 // pred_check_branch
          %338 = sbr.rel (%p336) target = $region24
        $region23: #{tpu_custom_call.1} parent=11 // pred_region
          _
        $region24: #{tpu_custom_call.1} parent=11 // pred_fallthru
          _
        // Predicated region
        $region25: #{tpu_custom_call.1} parent=11 // pred_check
          %p339 = pneg %p202
        $region26: #{tpu_custom_call.1} parent=11 // pred_check_branch
          %341 = sbr.rel (%p339) target = $region28
        $region27: #{tpu_custom_call.1} parent=11 // pred_region
          _
        $region28: #{tpu_custom_call.1} parent=11 // pred_fallthru
          _
        // Predicated region
        $region29: #{tpu_custom_call.1} parent=11 // pred_check
          %p342 = pneg %p223
        $region30: #{tpu_custom_call.1} parent=11 // pred_check_branch
          %344 = sbr.rel (%p342) target = $region32
        $region31: #{tpu_custom_call.1} parent=11 // pred_region
          _
        $region32: #{tpu_custom_call.1} parent=11 // pred_fallthru
          _
        // Predicated region
        $region33: #{tpu_custom_call.1} parent=11 // pred_check
          %p345 = pneg %p244
        $region34: #{tpu_custom_call.1} parent=11 // pred_check_branch
          %347 = sbr.rel (%p345) target = $region36
        $region35: #{tpu_custom_call.1} parent=11 // pred_region
          %349 = vsyncadd [#allocation11], 0
          %s350 = sshll.u32 %s8, 4
          %s351 = int_to_ptr.hbm [resolvable:$true] %s350
          %s352 = sshll.u32 [#allocation10], 4
          %s353 = int_to_ptr.vmem [resolvable:$true] %s352
          %358 = dma.hbm_to_vmem [thread:$0]  %s351, 2048, %s353, [#allocation11], 128, 128, 8
        $region36: #{tpu_custom_call.1} parent=11 // pred_fallthru
          _
        // Predicated region
        $region37: #{tpu_custom_call.1} parent=11 // pred_check
          %p359 = pneg %p265
        $region38: #{tpu_custom_call.1} parent=11 // pred_check_branch
          %361 = sbr.rel (%p359) target = $region40
        $region39: #{tpu_custom_call.1} parent=11 // pred_region
          _
        $region40: #{tpu_custom_call.1} parent=11 // pred_fallthru
          _
      $region12: #{tpu_custom_call.1} parent=5 // pred_fallthru
        _
      %p362 = scmp.lt.s32.totalorder %s24, 4
      // Predicated region
      $region41: #{tpu_custom_call.1} parent=5 // pred_check
        %p363 = pneg %p362
      $region42: #{tpu_custom_call.1} parent=5 // pred_check_branch
        %365 = sbr.rel (%p363) target = $region44
      $region43: #{tpu_custom_call.1} parent=5 // pred_region
        // Predicated region
        $region45: #{tpu_custom_call.1} parent=43 // pred_check
          %p366 = pneg %p56
        $region46: #{tpu_custom_call.1} parent=43 // pred_check_branch
          %368 = sbr.rel (%p366) target = $region48
        $region47: #{tpu_custom_call.1} parent=43 // pred_region
          %s369 = sand.u32 %s46, 1
          %s370 = scalar_lea.sflag [#allocation5], %s369
          %s371 = sand.u32 %s46, 1
          %s372 = smul.addr %s371, 8
          %s373 = scalar_lea.vmem [#allocation4], %s372
          %375 = vsyncadd %s370, 0
          %s376 = smul.addr %s31, 8
          %s377 = scalar_lea.hbm %s0, %s376
          %s379 = sshll.u32 %s377, 4
          %s380 = int_to_ptr.hbm [resolvable:$true] %s379
          %s381 = sshll.u32 %s373, 4
          %s382 = int_to_ptr.vmem [resolvable:$true] %s381
          %384 = dma.hbm_to_vmem [thread:$0]  %s380, 128, %s382, %s370
        $region48: #{tpu_custom_call.1} parent=43 // pred_fallthru
          _
        // Predicated region
        $region49: #{tpu_custom_call.1} parent=43 // pred_check
          %p385 = pneg %p84
        $region50: #{tpu_custom_call.1} parent=43 // pred_check_branch
          %387 = sbr.rel (%p385) target = $region52
        $region51: #{tpu_custom_call.1} parent=43 // pred_region
          %s388 = smul.u32 8, %s32
          %p389 = scmp.lt.s32.totalorder %s31, 1
          %s390 = scalar_select %p389, %s31, 1
          %p391 = scmp.lt.s32.totalorder %s388, 15
          %s392 = scalar_select %p391, %s388, 15
          %s393 = smul.addr %s390, 16
          %s394 = sadd.s32 %s392, %s393
          %s395 = smul.addr %s394, 8
          %s396 = scalar_lea.vmem %s1, %s395
          %s397 = smul.u32 8, %s32
        $region52: #{tpu_custom_call.1} parent=43 // pred_fallthru
          _
        // Predicated region
        $region53: #{tpu_custom_call.1} parent=43 // pred_check
          %p398 = pneg %p112
        $region54: #{tpu_custom_call.1} parent=43 // pred_check_branch
          %400 = sbr.rel (%p398) target = $region56
        $region55: #{tpu_custom_call.1} parent=43 // pred_region
          %s401 = smul.u32 8, %s32
          %p402 = scmp.lt.s32.totalorder %s31, 1
          %s403 = scalar_select %p402, %s31, 1
          %p404 = scmp.lt.s32.totalorder %s401, 15
          %s405 = scalar_select %p404, %s401, 15
          %s406 = smul.addr %s403, 16
          %s407 = sadd.s32 %s405, %s406
          %s408 = smul.addr %s407, 8
          %s409 = scalar_lea.vmem %s2, %s408
          %s410 = smul.u32 8, %s32
        $region56: #{tpu_custom_call.1} parent=43 // pred_fallthru
          _
      $region44: #{tpu_custom_call.1} parent=5 // pred_fallthru
        _
      %p411 = scmp.le.s32.totalorder 1, %s24
      %p412 = scmp.lt.s32.totalorder %s24, 5
      %p413 = pnand %p411, %p412
      %p414 = pneg %p413
      // Predicated region
      $region57: #{tpu_custom_call.1} parent=5 // pred_check
        _
      $region58: #{tpu_custom_call.1} parent=5 // pred_check_branch
        %416 = sbr.rel (%p413) target = $region60
      $region59: #{tpu_custom_call.1} parent=5 // pred_region
        %s417 = ssub.s32 %s24, 1
        %s418 = sand.u32 %s49, 1
        %s419 = scalar_lea.sflag [#allocation5], %s418
        %s420 = sand.u32 %s49, 1
        %s421 = smul.addr %s420, 8
        %s422 = scalar_lea.vmem [#allocation4], %s421
        // Predicated region
        $region61: #{tpu_custom_call.1} parent=59 // pred_check
          %p423 = pneg %p62
        $region62: #{tpu_custom_call.1} parent=59 // pred_check_branch
          %425 = sbr.rel (%p423) target = $region64
        $region63: #{tpu_custom_call.1} parent=59 // pred_region
          %427 = dma.done %s419, 128
        $region64: #{tpu_custom_call.1} parent=59 // pred_fallthru
          _
        // Predicated region
        $region65: #{tpu_custom_call.1} parent=59 // pred_check
          %p428 = pneg %p139
        $region66: #{tpu_custom_call.1} parent=59 // pred_check_branch
          %430 = sbr.rel (%p428) target = $region68
        $region67: #{tpu_custom_call.1} parent=59 // pred_region
          %432 = dma.done [#allocation8], 2048
        $region68: #{tpu_custom_call.1} parent=59 // pred_fallthru
          _
        // Predicated region
        $region69: #{tpu_custom_call.1} parent=59 // pred_check
          %p433 = pneg %p160
        $region70: #{tpu_custom_call.1} parent=59 // pred_check_branch
          %435 = sbr.rel (%p433) target = $region72
        $region71: #{tpu_custom_call.1} parent=59 // pred_region
          %437 = dma.done [#allocation8], 2048
        $region72: #{tpu_custom_call.1} parent=59 // pred_fallthru
          _
        // Predicated region
        $region73: #{tpu_custom_call.1} parent=59 // pred_check
          %p438 = pneg %p244
        $region74: #{tpu_custom_call.1} parent=59 // pred_check_branch
          %440 = sbr.rel (%p438) target = $region76
        $region75: #{tpu_custom_call.1} parent=59 // pred_region
          %442 = dma.done [#allocation11], 2048
        $region76: #{tpu_custom_call.1} parent=59 // pred_fallthru
          _
        %s443 = sand.u32 %s49, 1
        %s444 = scalar_lea.sflag [#allocation5], %s443
        %s445 = sand.u32 %s49, 1
        %s446 = smul.addr %s445, 8
        %s447 = scalar_lea.vmem [#allocation4], %s446
        %p448 = pneg %p62
        %p449 = pneg %p59
        %s450 = smul.u32 8, %s34
        %p451 = scmp.lt.s32.totalorder %s33, 1
        %s452 = scalar_select %p451, %s33, 1
        %p453 = scmp.lt.s32.totalorder %s450, 15
        %s454 = scalar_select %p453, %s450, 15
        %s455 = smul.addr %s452, 16
        %s456 = sadd.s32 %s454, %s455
        %s457 = smul.addr %s456, 8
        %s458 = scalar_lea.vmem %s1, %s457
        %p459 = pneg %p90
        %p460 = pneg %p87
        %s461 = smul.u32 8, %s34
        %p462 = scmp.lt.s32.totalorder %s33, 1
        %s463 = scalar_select %p462, %s33, 1
        %p464 = scmp.lt.s32.totalorder %s461, 15
        %s465 = scalar_select %p464, %s461, 15
        %s466 = smul.addr %s463, 16
        %s467 = sadd.s32 %s465, %s466
        %s468 = smul.addr %s467, 8
        %s469 = scalar_lea.vmem %s2, %s468
        %p470 = pneg %p118
        %p471 = pneg %p115
        %p472 = pneg %p139
        %p473 = pneg %p136
        %p474 = pneg %p160
        %p475 = pneg %p157
        %p476 = pneg %p181
        %p477 = pneg %p178
        %p478 = pneg %p202
        %p479 = pneg %p199
        %p480 = pneg %p223
        %p481 = pneg %p220
        %p482 = pneg %p244
        %p483 = pneg %p241
        %p484 = pneg %p265
        %p485 = pneg %p262
        %p486 = pneg %p293
        %p487 = pneg %p290
        %s488 = sand.u32 %s280, 1
        %s489 = scalar_lea.sflag [#allocation6], %s488
        %s490 = sand.u32 %s280, 1
        %s491 = smul.addr %s490, 64
        %s492 = scalar_lea.vmem [#allocation12], %s491
        %s493 = smul.u32 8, %s34
        %p494 = scmp.lt.s32.totalorder %s33, 1
        %s495 = scalar_select %p494, %s33, 1
        %p496 = scmp.lt.s32.totalorder %s493, 15
        %s497 = scalar_select %p496, %s493, 15
        %s498 = smul.addr %s495, 16
        %s499 = sadd.s32 %s497, %s498
        %s500 = smul.addr %s499, 8
        %s501 = scalar_lea.vmem %s1, %s500
        %s502 = smul.u32 8, %s34
        %s503 = smul.u32 8, %s34
        %p504 = scmp.lt.s32.totalorder %s33, 1
        %s505 = scalar_select %p504, %s33, 1
        %p506 = scmp.lt.s32.totalorder %s503, 15
        %s507 = scalar_select %p506, %s503, 15
        %s508 = smul.addr %s505, 16
        %s509 = sadd.s32 %s507, %s508
        %s510 = smul.addr %s509, 8
        %s511 = scalar_lea.vmem %s2, %s510
        %s512 = smul.u32 8, %s34
        %s513 = smul.u32 8, %s34
        %p514 = scmp.eq.s32.totalorder %s34, 0
        // Predicated region
        $region77: #{tpu_custom_call.1} parent=59 // pred_check
          %p515 = pneg %p514
        $region78: #{tpu_custom_call.1} parent=59 // pred_check_branch
          %517 = sbr.rel (%p515) target = $region80
        $region79: #{tpu_custom_call.1} parent=59 // pred_region
          %v518 = vld [vmem:[%s422] sm:$0xff]
          %519 = vst [vmem:[#allocation2] sm:$0xff] %v518
        $region80: #{tpu_custom_call.1} parent=59 // pred_fallthru
          _
        %v520 = vld [vmem:[%s501] sm:$0xff]
        %v521 = vld [vmem:[%s501 + $0x8] sm:$0xff]
        %v522 = vld [vmem:[%s501 + $0x10] sm:$0xff]
        %v523 = vld [vmem:[%s501 + $0x18] sm:$0xff]
        %v524 = vld [vmem:[%s501 + $0x20] sm:$0xff]
        %v525 = vld [vmem:[%s501 + $0x28] sm:$0xff]
        %v526 = vld [vmem:[%s501 + $0x30] sm:$0xff]
        %v527 = vld [vmem:[%s501 + $0x38] sm:$0xff]
        %v528 = vld [vmem:[#allocation9] sm:$0xff]
        %v529 = vld [vmem:[#allocation9 + $0x8] sm:$0xff]
        %v530 = vld [vmem:[#allocation9 + $0x10] sm:$0xff]
        %v531 = vld [vmem:[#allocation9 + $0x18] sm:$0xff]
        %v532 = vld [vmem:[#allocation9 + $0x20] sm:$0xff]
        %v533 = vld [vmem:[#allocation9 + $0x28] sm:$0xff]
        %v534 = vld [vmem:[#allocation9 + $0x30] sm:$0xff]
        %v535 = vld [vmem:[#allocation9 + $0x38] sm:$0xff]
        %v536 = vld [vmem:[#allocation9 + $0x40] sm:$0xff]
        %v537 = vld [vmem:[#allocation9 + $0x48] sm:$0xff]
        %v538 = vld [vmem:[#allocation9 + $0x50] sm:$0xff]
        %v539 = vld [vmem:[#allocation9 + $0x58] sm:$0xff]
        %v540 = vld [vmem:[#allocation9 + $0x60] sm:$0xff]
        %v541 = vld [vmem:[#allocation9 + $0x68] sm:$0xff]
        %v542 = vld [vmem:[#allocation9 + $0x70] sm:$0xff]
        %v543 = vld [vmem:[#allocation9 + $0x78] sm:$0xff]
        %v544 = vld [vmem:[%s5] sm:$0x1]
        %v546 = vperm.slane %v544, 0
        %548 = vmatpush.msra.mxu0 %v543
        %549 = vmatpush.msra.mxu0 %v542
        %550 = vmatpush.msra.mxu0 %v541
        %551 = vmatpush.msra.mxu0 %v540
        %552 = vmatpush.msra.mxu0 %v539
        %553 = vmatpush.msra.mxu0 %v538
        %554 = vmatpush.msra.mxu0 %v537
        %555 = vmatpush.msra.mxu0 %v536
        %556 = vmatpush.msra.mxu0 %v535
        %557 = vmatpush.msra.mxu0 %v534
        %558 = vmatpush.msra.mxu0 %v533
        %559 = vmatpush.msra.mxu0 %v532
        %560 = vmatpush.msra.mxu0 %v531
        %561 = vmatpush.msra.mxu0 %v530
        %562 = vmatpush.msra.mxu0 %v529
        %563 = vmatpush.msra.mxu0 %v528
        %564 = vmatmul.f32.gmra.mxu0 %v520
        %v565 = vpop.f32.mrf.mxu0
        %v566 = vadd.f32 %v546, %v565
        %567 = vmatmul.f32.gmra.mxu0 %v521
        %v568 = vpop.f32.mrf.mxu0
        %v569 = vadd.f32 %v546, %v568
        %570 = vmatmul.f32.gmra.mxu0 %v522
        %v571 = vpop.f32.mrf.mxu0
        %v572 = vadd.f32 %v546, %v571
        %573 = vmatmul.f32.gmra.mxu0 %v523
        %v574 = vpop.f32.mrf.mxu0
        %v575 = vadd.f32 %v546, %v574
        %576 = vmatmul.f32.gmra.mxu0 %v524
        %v577 = vpop.f32.mrf.mxu0
        %v578 = vadd.f32 %v546, %v577
        %579 = vmatmul.f32.gmra.mxu0 %v525
        %v580 = vpop.f32.mrf.mxu0
        %v581 = vadd.f32 %v546, %v580
        %582 = vmatmul.f32.gmra.mxu0 %v526
        %v583 = vpop.f32.mrf.mxu0
        %v584 = vadd.f32 %v546, %v583
        %585 = vmatmul.f32.gmra.mxu0 %v527
        %v586 = vpop.f32.mrf.mxu0
        %v587 = vadd.f32 %v546, %v586
        %588 = vdwg.mxu0
        %589 = vst [vmem:[#allocation3] sm:$0xff] %v566
        %590 = vst [vmem:[#allocation3 + $0x8] sm:$0xff] %v569
        %591 = vst [vmem:[#allocation3 + $0x10] sm:$0xff] %v572
        %592 = vst [vmem:[#allocation3 + $0x18] sm:$0xff] %v575
        %593 = vst [vmem:[#allocation3 + $0x20] sm:$0xff] %v578
        %594 = vst [vmem:[#allocation3 + $0x28] sm:$0xff] %v581
        %595 = vst [vmem:[#allocation3 + $0x30] sm:$0xff] %v584
        %596 = vst [vmem:[#allocation3 + $0x38] sm:$0xff] %v587
        %v597 = vld [vmem:[%s6] sm:$0x1]
        %v599 = vperm.slane %v597, 0
        %v601 = vld [vmem:[%s7] sm:$0x1]
        %v603 = vperm.slane %v601, 0
        %v605 = vld [vmem:[#allocation2] sm:$0xff]
        loop: start=0, step=1, limit=8
        $region81: #{tpu_custom_call.1} parent=59 // loop_pre_header
          _
        $region82: #{tpu_custom_call.1} parent=59 // loop_header
          %s607 = sphi 0, %s611
          %p608 = scmp.ge.s32.totalorder %s607, 8
          %v612 = vphi %v605, %v821
        $region83: #{tpu_custom_call.1} parent=59 // loop_header_branch
          %610 = sbr.rel (%p608) target = $region87
        $region84: #{tpu_custom_call.1} parent=59 // loop_body
          %s613 = smul.u32 %s607, 8
          %s614 = scalar_lea.vmem [#allocation3], %s613
          %v615 = vld [vmem:[%s614] sm:$0xff]
          %s616 = scalar_lea.vmem %s511, %s613
          %v617 = vld [vmem:[%s616] sm:$0xff]
          %619 = vset.pattern.permute.xlu0 0
          %620 = vperm.xlu0 %619, %v617
          %v621 = vpop.permute.xlu0 %620
          %v623 = vmul.f32 %v621, %v599
          %v624 = vmul.f32 %v621, %v603
          %v625 = vadd.f32 %v624, 1.0
          %v626 = vld [vmem:[#allocation7] sm:$0xff]
          %v627 = vld [vmem:[#allocation7 + $0x8] sm:$0xff]
          %v628 = vld [vmem:[#allocation7 + $0x10] sm:$0xff]
          %v629 = vld [vmem:[#allocation7 + $0x18] sm:$0xff]
          %v630 = vld [vmem:[#allocation7 + $0x20] sm:$0xff]
          %v631 = vld [vmem:[#allocation7 + $0x28] sm:$0xff]
          %v632 = vld [vmem:[#allocation7 + $0x30] sm:$0xff]
          %v633 = vld [vmem:[#allocation7 + $0x38] sm:$0xff]
          %v634 = vld [vmem:[#allocation7 + $0x40] sm:$0xff]
          %v635 = vld [vmem:[#allocation7 + $0x48] sm:$0xff]
          %v636 = vld [vmem:[#allocation7 + $0x50] sm:$0xff]
          %v637 = vld [vmem:[#allocation7 + $0x58] sm:$0xff]
          %v638 = vld [vmem:[#allocation7 + $0x60] sm:$0xff]
          %v639 = vld [vmem:[#allocation7 + $0x68] sm:$0xff]
          %v640 = vld [vmem:[#allocation7 + $0x70] sm:$0xff]
          %v641 = vld [vmem:[#allocation7 + $0x78] sm:$0xff]
          %642 = vmatpush.msra.mxu0 %v641
          %643 = vmatpush.msra.mxu0 %v640
          %644 = vmatpush.msra.mxu0 %v639
          %645 = vmatpush.msra.mxu0 %v638
          %646 = vmatpush.msra.mxu0 %v637
          %647 = vmatpush.msra.mxu0 %v636
          %648 = vmatpush.msra.mxu0 %v635
          %649 = vmatpush.msra.mxu0 %v634
          %650 = vmatpush.msra.mxu0 %v633
          %651 = vmatpush.msra.mxu0 %v632
          %652 = vmatpush.msra.mxu0 %v631
          %653 = vmatpush.msra.mxu0 %v630
          %654 = vmatpush.msra.mxu0 %v629
          %655 = vmatpush.msra.mxu0 %v628
          %656 = vmatpush.msra.mxu0 %v627
          %657 = vmatpush.msra.mxu0 %v626
          %658 = vmatmul.f32.gmra.mxu0 %v612
          %v659 = vpop.f32.mrf.mxu0
          %v660 = vadd.f32 %v615, %v659
          %661 = vdwg.mxu0
          %v662 = vtanh.pop %v660
          %v663 = vmul.f32 %v623, %v662
          %v664 = vadd.f32 %v612, %v663
          %v665 = vmul.f32 %v621, %v662
          %v666 = vadd.f32 %v625, %v665
          %v667 = vrcp.pop %v666
          %v668 = vmul.f32 %v666, %v667
          %v669 = vsub.f32 2.0, %v668
          %v670 = vmul.f32 %v667, %v669
          %v671 = vmul.f32 %v664, %v670
          %672 = vmatpush.msra.mxu0 %v641
          %673 = vmatpush.msra.mxu0 %v640
          %674 = vmatpush.msra.mxu0 %v639
          %675 = vmatpush.msra.mxu0 %v638
          %676 = vmatpush.msra.mxu0 %v637
          %677 = vmatpush.msra.mxu0 %v636
          %678 = vmatpush.msra.mxu0 %v635
          %679 = vmatpush.msra.mxu0 %v634
          %680 = vmatpush.msra.mxu0 %v633
          %681 = vmatpush.msra.mxu0 %v632
          %682 = vmatpush.msra.mxu0 %v631
          %683 = vmatpush.msra.mxu0 %v630
          %684 = vmatpush.msra.mxu0 %v629
          %685 = vmatpush.msra.mxu0 %v628
          %686 = vmatpush.msra.mxu0 %v627
          %687 = vmatpush.msra.mxu0 %v626
          %688 = vmatmul.f32.gmra.mxu0 %v671
          %v689 = vpop.f32.mrf.mxu0
          %v690 = vadd.f32 %v615, %v689
          %691 = vdwg.mxu0
          %v692 = vtanh.pop %v690
          %v693 = vmul.f32 %v623, %v692
          %v694 = vadd.f32 %v671, %v693
          %v695 = vmul.f32 %v621, %v692
          %v696 = vadd.f32 %v625, %v695
          %v697 = vrcp.pop %v696
          %v698 = vmul.f32 %v696, %v697
          %v699 = vsub.f32 2.0, %v698
          %v700 = vmul.f32 %v697, %v699
          %v701 = vmul.f32 %v694, %v700
          %702 = vmatpush.msra.mxu0 %v641
          %703 = vmatpush.msra.mxu0 %v640
          %704 = vmatpush.msra.mxu0 %v639
          %705 = vmatpush.msra.mxu0 %v638
          %706 = vmatpush.msra.mxu0 %v637
          %707 = vmatpush.msra.mxu0 %v636
          %708 = vmatpush.msra.mxu0 %v635
          %709 = vmatpush.msra.mxu0 %v634
          %710 = vmatpush.msra.mxu0 %v633
          %711 = vmatpush.msra.mxu0 %v632
          %712 = vmatpush.msra.mxu0 %v631
          %713 = vmatpush.msra.mxu0 %v630
          %714 = vmatpush.msra.mxu0 %v629
          %715 = vmatpush.msra.mxu0 %v628
          %716 = vmatpush.msra.mxu0 %v627
          %717 = vmatpush.msra.mxu0 %v626
          %718 = vmatmul.f32.gmra.mxu0 %v701
          %v719 = vpop.f32.mrf.mxu0
          %v720 = vadd.f32 %v615, %v719
          %721 = vdwg.mxu0
          %v722 = vtanh.pop %v720
          %v723 = vmul.f32 %v623, %v722
          %v724 = vadd.f32 %v701, %v723
          %v725 = vmul.f32 %v621, %v722
          %v726 = vadd.f32 %v625, %v725
          %v727 = vrcp.pop %v726
          %v728 = vmul.f32 %v726, %v727
          %v729 = vsub.f32 2.0, %v728
          %v730 = vmul.f32 %v727, %v729
          %v731 = vmul.f32 %v724, %v730
          %732 = vmatpush.msra.mxu0 %v641
          %733 = vmatpush.msra.mxu0 %v640
          %734 = vmatpush.msra.mxu0 %v639
          %735 = vmatpush.msra.mxu0 %v638
          %736 = vmatpush.msra.mxu0 %v637
          %737 = vmatpush.msra.mxu0 %v636
          %738 = vmatpush.msra.mxu0 %v635
          %739 = vmatpush.msra.mxu0 %v634
          %740 = vmatpush.msra.mxu0 %v633
          %741 = vmatpush.msra.mxu0 %v632
          %742 = vmatpush.msra.mxu0 %v631
          %743 = vmatpush.msra.mxu0 %v630
          %744 = vmatpush.msra.mxu0 %v629
          %745 = vmatpush.msra.mxu0 %v628
          %746 = vmatpush.msra.mxu0 %v627
          %747 = vmatpush.msra.mxu0 %v626
          %748 = vmatmul.f32.gmra.mxu0 %v731
          %v749 = vpop.f32.mrf.mxu0
          %v750 = vadd.f32 %v615, %v749
          %751 = vdwg.mxu0
          %v752 = vtanh.pop %v750
          %v753 = vmul.f32 %v623, %v752
          %v754 = vadd.f32 %v731, %v753
          %v755 = vmul.f32 %v621, %v752
          %v756 = vadd.f32 %v625, %v755
          %v757 = vrcp.pop %v756
          %v758 = vmul.f32 %v756, %v757
          %v759 = vsub.f32 2.0, %v758
          %v760 = vmul.f32 %v757, %v759
          %v761 = vmul.f32 %v754, %v760
          %762 = vmatpush.msra.mxu0 %v641
          %763 = vmatpush.msra.mxu0 %v640
          %764 = vmatpush.msra.mxu0 %v639
          %765 = vmatpush.msra.mxu0 %v638
          %766 = vmatpush.msra.mxu0 %v637
          %767 = vmatpush.msra.mxu0 %v636
          %768 = vmatpush.msra.mxu0 %v635
          %769 = vmatpush.msra.mxu0 %v634
          %770 = vmatpush.msra.mxu0 %v633
          %771 = vmatpush.msra.mxu0 %v632
          %772 = vmatpush.msra.mxu0 %v631
          %773 = vmatpush.msra.mxu0 %v630
          %774 = vmatpush.msra.mxu0 %v629
          %775 = vmatpush.msra.mxu0 %v628
          %776 = vmatpush.msra.mxu0 %v627
          %777 = vmatpush.msra.mxu0 %v626
          %778 = vmatmul.f32.gmra.mxu0 %v761
          %v779 = vpop.f32.mrf.mxu0
          %v780 = vadd.f32 %v615, %v779
          %781 = vdwg.mxu0
          %v782 = vtanh.pop %v780
          %v783 = vmul.f32 %v623, %v782
          %v784 = vadd.f32 %v761, %v783
          %v785 = vmul.f32 %v621, %v782
          %v786 = vadd.f32 %v625, %v785
          %v787 = vrcp.pop %v786
          %v788 = vmul.f32 %v786, %v787
          %v789 = vsub.f32 2.0, %v788
          %v790 = vmul.f32 %v787, %v789
          %v791 = vmul.f32 %v784, %v790
          %792 = vmatpush.msra.mxu0 %v641
          %793 = vmatpush.msra.mxu0 %v640
          %794 = vmatpush.msra.mxu0 %v639
          %795 = vmatpush.msra.mxu0 %v638
          %796 = vmatpush.msra.mxu0 %v637
          %797 = vmatpush.msra.mxu0 %v636
          %798 = vmatpush.msra.mxu0 %v635
          %799 = vmatpush.msra.mxu0 %v634
          %800 = vmatpush.msra.mxu0 %v633
          %801 = vmatpush.msra.mxu0 %v632
          %802 = vmatpush.msra.mxu0 %v631
          %803 = vmatpush.msra.mxu0 %v630
          %804 = vmatpush.msra.mxu0 %v629
          %805 = vmatpush.msra.mxu0 %v628
          %806 = vmatpush.msra.mxu0 %v627
          %807 = vmatpush.msra.mxu0 %v626
          %808 = vmatmul.f32.gmra.mxu0 %v791
          %v809 = vpop.f32.mrf.mxu0
          %v810 = vadd.f32 %v615, %v809
          %811 = vdwg.mxu0
          %v812 = vtanh.pop %v810
          %v813 = vmul.f32 %v623, %v812
          %v814 = vadd.f32 %v791, %v813
          %v815 = vmul.f32 %v621, %v812
          %v816 = vadd.f32 %v625, %v815
          %v817 = vrcp.pop %v816
          %v818 = vmul.f32 %v816, %v817
          %v819 = vsub.f32 2.0, %v818
          %v820 = vmul.f32 %v817, %v819
          %v821 = vmul.f32 %v814, %v820
          %822 = vst [vmem:[%s614] sm:$0xff] %v821
        $region85: #{tpu_custom_call.1} parent=59 // loop_footer
          %s611 = sadd.s32 1, %s607
        $region86: #{tpu_custom_call.1} parent=59 // loop_footer_branch
          %606 = sbr.rel target = $region82
        $region87: #{tpu_custom_call.1} parent=59 // loop_exit
          _
        %823 = vst [vmem:[#allocation2] sm:$0xff] %v612
        %v824 = vld [vmem:[#allocation3] sm:$0xff]
        %v825 = vld [vmem:[#allocation3 + $0x8] sm:$0xff]
        %v826 = vld [vmem:[#allocation3 + $0x10] sm:$0xff]
        %v827 = vld [vmem:[#allocation3 + $0x18] sm:$0xff]
        %v828 = vld [vmem:[#allocation3 + $0x20] sm:$0xff]
        %v829 = vld [vmem:[#allocation3 + $0x28] sm:$0xff]
        %v830 = vld [vmem:[#allocation3 + $0x30] sm:$0xff]
        %v831 = vld [vmem:[#allocation3 + $0x38] sm:$0xff]
        %v832 = vld [vmem:[#allocation10] sm:$0xff]
        %v833 = vld [vmem:[#allocation10 + $0x8] sm:$0xff]
        %v834 = vld [vmem:[#allocation10 + $0x10] sm:$0xff]
        %v835 = vld [vmem:[#allocation10 + $0x18] sm:$0xff]
        %v836 = vld [vmem:[#allocation10 + $0x20] sm:$0xff]
        %v837 = vld [vmem:[#allocation10 + $0x28] sm:$0xff]
        %v838 = vld [vmem:[#allocation10 + $0x30] sm:$0xff]
        %v839 = vld [vmem:[#allocation10 + $0x38] sm:$0xff]
        %v840 = vld [vmem:[#allocation10 + $0x40] sm:$0xff]
        %v841 = vld [vmem:[#allocation10 + $0x48] sm:$0xff]
        %v842 = vld [vmem:[#allocation10 + $0x50] sm:$0xff]
        %v843 = vld [vmem:[#allocation10 + $0x58] sm:$0xff]
        %v844 = vld [vmem:[#allocation10 + $0x60] sm:$0xff]
        %v845 = vld [vmem:[#allocation10 + $0x68] sm:$0xff]
        %v846 = vld [vmem:[#allocation10 + $0x70] sm:$0xff]
        %v847 = vld [vmem:[#allocation10 + $0x78] sm:$0xff]
        %v848 = vld [vmem:[%s9] sm:$0x1]
        %v850 = vperm.slane %v848, 0
        %852 = vmatpush.msra.mxu0 %v847
        %853 = vmatpush.msra.mxu0 %v846
        %854 = vmatpush.msra.mxu0 %v845
        %855 = vmatpush.msra.mxu0 %v844
        %856 = vmatpush.msra.mxu0 %v843
        %857 = vmatpush.msra.mxu0 %v842
        %858 = vmatpush.msra.mxu0 %v841
        %859 = vmatpush.msra.mxu0 %v840
        %860 = vmatpush.msra.mxu0 %v839
        %861 = vmatpush.msra.mxu0 %v838
        %862 = vmatpush.msra.mxu0 %v837
        %863 = vmatpush.msra.mxu0 %v836
        %864 = vmatpush.msra.mxu0 %v835
        %865 = vmatpush.msra.mxu0 %v834
        %866 = vmatpush.msra.mxu0 %v833
        %867 = vmatpush.msra.mxu0 %v832
        %868 = vmatmul.f32.gmra.mxu0 %v824
        %v869 = vpop.f32.mrf.mxu0
        %v870 = vadd.f32 %v850, %v869
        %871 = vmatmul.f32.gmra.mxu0 %v825
        %v872 = vpop.f32.mrf.mxu0
        %v873 = vadd.f32 %v850, %v872
        %874 = vmatmul.f32.gmra.mxu0 %v826
        %v875 = vpop.f32.mrf.mxu0
        %v876 = vadd.f32 %v850, %v875
        %877 = vmatmul.f32.gmra.mxu0 %v827
        %v878 = vpop.f32.mrf.mxu0
        %v879 = vadd.f32 %v850, %v878
        %880 = vmatmul.f32.gmra.mxu0 %v828
        %v881 = vpop.f32.mrf.mxu0
        %v882 = vadd.f32 %v850, %v881
        %883 = vmatmul.f32.gmra.mxu0 %v829
        %v884 = vpop.f32.mrf.mxu0
        %v885 = vadd.f32 %v850, %v884
        %886 = vmatmul.f32.gmra.mxu0 %v830
        %v887 = vpop.f32.mrf.mxu0
        %v888 = vadd.f32 %v850, %v887
        %889 = vmatmul.f32.gmra.mxu0 %v831
        %v890 = vpop.f32.mrf.mxu0
        %v891 = vadd.f32 %v850, %v890
        %892 = vdwg.mxu0
        %893 = vst [vmem:[%s492] sm:$0xff] %v870
        %894 = vst [vmem:[%s492 + $0x8] sm:$0xff] %v873
        %895 = vst [vmem:[%s492 + $0x10] sm:$0xff] %v876
        %896 = vst [vmem:[%s492 + $0x18] sm:$0xff] %v879
        %897 = vst [vmem:[%s492 + $0x20] sm:$0xff] %v882
        %898 = vst [vmem:[%s492 + $0x28] sm:$0xff] %v885
        %899 = vst [vmem:[%s492 + $0x30] sm:$0xff] %v888
        %900 = vst [vmem:[%s492 + $0x38] sm:$0xff] %v891
        %s901 = sand.u32 %s280, 1
        %s902 = scalar_lea.sflag [#allocation6], %s901
        %s903 = sand.u32 %s280, 1
        %s904 = smul.addr %s903, 64
        %s905 = scalar_lea.vmem [#allocation12], %s904
        // Predicated region
        $region88: #{tpu_custom_call.1} parent=59 // pred_check
          %p906 = pneg %p290
        $region89: #{tpu_custom_call.1} parent=59 // pred_check_branch
          %908 = sbr.rel (%p906) target = $region91
        $region90: #{tpu_custom_call.1} parent=59 // pred_region
          %s909 = smul.u32 8, %s34
          %911 = vsyncadd %s902, 0
          %s912 = smul.addr %s33, 16
          %s913 = sadd.s32 %s909, %s912
          %s914 = smul.addr %s913, 8
          %s915 = scalar_lea.hbm %s10, %s914
          %s916 = sshll.u32 %s905, 4
          %s917 = int_to_ptr.vmem [resolvable:$true] %s916
          %s918 = sshll.u32 %s915, 4
          %s919 = int_to_ptr.hbm [resolvable:$true] %s918
          %924 = dma.vmem_to_hbm [thread:$0]  %s917, 1024, %s919, %s902, 128, 128, 8
        $region91: #{tpu_custom_call.1} parent=59 // pred_fallthru
          _
      $region60: #{tpu_custom_call.1} parent=5 // pred_fallthru
        _
      %p925 = scmp.le.s32.totalorder 2, %s24
      // Predicated region
      $region92: #{tpu_custom_call.1} parent=5 // pred_check
        %p926 = pneg %p925
      $region93: #{tpu_custom_call.1} parent=5 // pred_check_branch
        %928 = sbr.rel (%p926) target = $region95
      $region94: #{tpu_custom_call.1} parent=5 // pred_region
        %s929 = ssub.s32 %s24, 2
        // Predicated region
        $region96: #{tpu_custom_call.1} parent=94 // pred_check
          %p930 = pneg %p296
        $region97: #{tpu_custom_call.1} parent=94 // pred_check_branch
          %932 = sbr.rel (%p930) target = $region99
        $region98: #{tpu_custom_call.1} parent=94 // pred_region
          %s933 = sand.u32 %s281, 1
          %s934 = scalar_lea.sflag [#allocation6], %s933
          %s935 = sand.u32 %s281, 1
          %s936 = smul.addr %s935, 64
          %s937 = scalar_lea.vmem [#allocation12], %s936
          %939 = dma.done %s934, 1024
        $region99: #{tpu_custom_call.1} parent=94 // pred_fallthru
          _
      $region95: #{tpu_custom_call.1} parent=5 // pred_fallthru
        _
    $region6: #{tpu_custom_call.1} parent=1 // loop_footer
      %s28 = sadd.s32 1, %s24
    $region7: #{tpu_custom_call.1} parent=1 // loop_footer_branch
      %23 = sbr.rel target = $region3
    $region8: #{tpu_custom_call.1} parent=1 // loop_exit
      _
    %940 = vsyncpa [#allocation5], 1
    %s941 = scalar_lea.sflag [#allocation5], 1
    %942 = vsyncpa %s941, 1
    %943 = vsyncpa [#allocation8], 1
    %944 = vsyncpa [#allocation11], 1
    %945 = vsyncpa [#allocation6], 1
    %s946 = scalar_lea.sflag [#allocation6], 1
    %947 = vsyncpa %s946, 1

</llo_original>
